<compile_context>
chip_gen: v5e
topology: v5e:2x2
jax: 0.10.0
libtpu: 0.0.40
codegen_flags: <defaults>
</compile_context>

<pallas_src>
import math
from functools import lru_cache, partial

import numpy as np
import jax
import jax.numpy as jnp
from jax import lax
from jax.experimental import pallas as pl
from jax.experimental.pallas import tpu as pltpu

PADDING_ID = -1

_BLOCK_Q_CAP = 1024   # sublane-axis tile cap for the mask output
_BLOCK_K_CAP = 2048   # lane-axis tile cap (lane-dense writeback)
_MASK_DTYPES = {"bool": jnp.bool_, "int8": jnp.int8}


# --------------------------------------------------------------------------
# Pack + zero-pad the token stream (single pass over HBM).
# --------------------------------------------------------------------------
def pack_and_pad_tokens(pieces_2d, n_orig, n_padded, d, dtype):
    """einops.pack(..., 'b * d') + F.pad equivalent in one pass.

    Per the perf feedback, the zero tail is appended as an extra piece so a
    single XLA concatenate reads every token once and writes the padded
    (N, D) buffer once (no second Pallas copy pass over the stream).
    """
    pieces = list(pieces_2d)
    if n_padded > n_orig:
        pieces.append(jnp.zeros((n_padded - n_orig, d), dtype))
    packed = jnp.concatenate(pieces, axis=0) if len(pieces) > 1 else pieces[0]
    return packed.reshape(1, n_padded, d)


# --------------------------------------------------------------------------
# Pallas kernel: materialize the block-wise attention mask tile-by-tile.
# Pure HBM-writeback-bound; 1 byte/element written straight from the kernel.
# --------------------------------------------------------------------------
def _mask_kernel(*refs, mode, padding_id):
    if mode == "causal_last":
        q_ids_ref, kv_ids_ref, q_log_ref, kv_log_ref, kv_pref_ref, o_ref = refs
    else:
        q_ids_ref, kv_ids_ref, o_ref = refs

    qi = q_ids_ref[...]          # (block_q, 1) int32, per-tile
    ki = kv_ids_ref[...]         # (1, block_k) int32, per-tile
    same_seq = qi == ki
    not_padded = (qi != padding_id) | (ki != padding_id)

    if mode == "full":
        m = same_seq & not_padded
    elif mode == "causal":
        bq, bk = o_ref.shape
        q_glob = (pl.program_id(0) * bq
                  + lax.broadcasted_iota(jnp.int32, (bq, bk), 0))
        k_glob = (pl.program_id(1) * bk
                  + lax.broadcasted_iota(jnp.int32, (bq, bk), 1))
        m = same_seq & not_padded & (k_glob <= q_glob)
    elif mode == "causal_last":
        ql = q_log_ref[...]      # (block_q, 1) logical (within-seq) q index
        kl = kv_log_ref[...]     # (1, block_k) logical kv index
        kp = kv_pref_ref[...]    # (1, block_k) prefix length of kv's sequence
        m = same_seq & ((ql >= kl) | (kl < kp)) & not_padded
    else:
        raise ValueError(f"Invalid mask mode {mode}")

    o_ref[...] = m.astype(o_ref.dtype)


def _pick_block(n, cap):
    """Largest multiple-of-128 tile <= cap that divides n (n % 128 == 0)."""
    if n <= cap:
        return n
    b = (cap // 128) * 128
    while b > 128 and n % b:
        b -= 128
    return b


@lru_cache(maxsize=None)
def _build_mask_call(n, mode, block_q, block_k, out_dtype_name):
    """Build + jit one mask pallas_call; cached so forwards never re-lower."""
    out_dtype = _MASK_DTYPES[out_dtype_name]
    grid = (n // block_q, n // block_k)

    # Per-tile id specs: VMEM footprint scales with the tile, not with N.
    q_col = pl.BlockSpec((block_q, 1), lambda i, j: (i, 0))
    kv_row = pl.BlockSpec((1, block_k), lambda i, j: (0, j))
    if mode == "causal_last":
        in_specs = [q_col, kv_row, q_col, kv_row, kv_row]
    else:
        in_specs = [q_col, kv_row]

    call = pl.pallas_call(
        partial(_mask_kernel, mode=mode, padding_id=PADDING_ID),
        out_shape=jax.ShapeDtypeStruct((n, n), out_dtype),
        grid=grid,
        in_specs=in_specs,
        out_specs=pl.BlockSpec((block_q, block_k), lambda i, j: (i, j)),
        compiler_params=pltpu.CompilerParams(
            dimension_semantics=("parallel", "parallel"),
            vmem_limit_bytes=32 * 1024 * 1024),
    )
    return jax.jit(call)


@lru_cache(maxsize=None)
def _bool_mask_store_supported():
    """One-time (cached) capability probe for bool kernel outputs.

    Runs a tiny 128x128 'full' mask once; no per-forward try/except or
    host sync remains on the hot path.
    """
    try:
        ids = jnp.zeros((128,), jnp.int32)
        fn = _build_mask_call(128, "full", 128, 128, "bool")
        jax.block_until_ready(fn(ids.reshape(128, 1), ids.reshape(1, 128)))
        return True
    except Exception:
        return False


def materialize_block_mask(seq_ids, logical_pos, kv_prefix, mode,
                           block_q=None, block_k=None):
    """seq_ids/logical_pos/kv_prefix: (N,) int32 -> (1, 1, N, N) bool mask."""
    n = seq_ids.shape[0]
    assert n % 128 == 0
    block_q = block_q or _pick_block(n, _BLOCK_Q_CAP)
    block_k = block_k or _pick_block(n, _BLOCK_K_CAP)
    assert n % block_q == 0 and n % block_k == 0

    q_ids = seq_ids.reshape(n, 1).astype(jnp.int32)
    kv_ids = seq_ids.reshape(1, n).astype(jnp.int32)
    if mode == "causal_last":
        inputs = (q_ids, kv_ids,
                  logical_pos.reshape(n, 1).astype(jnp.int32),
                  logical_pos.reshape(1, n).astype(jnp.int32),
                  kv_prefix.reshape(1, n).astype(jnp.int32))
    else:
        inputs = (q_ids, kv_ids)

    if _bool_mask_store_supported():
        mask = _build_mask_call(n, mode, block_q, block_k, "bool")(*inputs)
    else:
        # Fallback: int8 kernel output + byte-wise cast (only taken if this
        # jax/Mosaic build cannot store bool from a kernel).
        mask = _build_mask_call(n, mode, block_q, block_k, "int8")(*inputs)
        mask = mask.astype(jnp.bool_)
    # TODO(synk): a FlexAttention-style block-level mask (O((N/blk)^2) metadata
    # consumed inside the attention kernel) would remove this dense N^2-byte
    # writeback entirely; kept dense to match return_materialized_mask=True.
    return mask[None, None]


# --------------------------------------------------------------------------
# Host-side glue mirroring BlockWiseSequencePacker.forward
# --------------------------------------------------------------------------
def next_highest_multiple(n, multiple):
    return multiple * math.ceil(n / multiple)


@lru_cache(maxsize=None)
def _static_mask_inputs(numels, prefix_lens, n_padded):
    """lru_cache'd seq-id / logical-pos / prefix bookkeeping (like the
    original generate_*_mask helpers); device transfer happens once per
    unique packing configuration."""
    seq_ids = np.concatenate(
        [np.full((m,), i, dtype=np.int32) for i, m in enumerate(numels)])
    n_orig = seq_ids.shape[0]
    seq_ids = np.pad(seq_ids, (0, n_padded - n_orig),
                     constant_values=PADDING_ID)
    offsets = np.concatenate([[0], np.cumsum(numels)[:-1]]).astype(np.int32)
    pos = np.arange(n_padded, dtype=np.int32)
    safe = np.clip(seq_ids, 0, None)
    logical = np.where(seq_ids != PADDING_ID, pos - offsets[safe], 0)
    pref = np.asarray(prefix_lens, np.int32)
    kv_pref = np.where(seq_ids != PADDING_ID, pref[safe], 0)
    return (jnp.asarray(seq_ids.astype(np.int32)),
            jnp.asarray(logical.astype(np.int32)),
            jnp.asarray(kv_pref.astype(np.int32)))


def block_wise_sequence_packer(
    data_dict,
    input_list_read_keys,
    packed_seq_write_key="packed_seq",
    block_mask_write_key="block_mask",
    inner_packed_shapes_write_key="inner_packed_shapes",
    outer_packed_shapes_write_key="outer_packed_shapes",
    mask_mode="full",
    max_seq_len=None,
    pad_to_multiple=None,
):
    if max_seq_len is not None and pad_to_multiple is not None:
        raise ValueError("Only one of max_seq_len or pad_to_multiple should be provided.")

    list_of_tensor_lists = [data_dict[k] for k in input_list_read_keys]
    lengths = {len(lst) for lst in list_of_tensor_lists}
    if len(lengths) != 1:
        raise ValueError("All input iterables must be of the same length")

    # einops.pack(tensors, 'b * d') bookkeeping; data movement is one concat.
    flat_pieces = []
    packed_shapes_list = []
    outer_ps = []
    d = None
    dtype = None
    n_orig = 0
    for tensors in zip(*list_of_tensor_lists):
        ps = []
        sample_len = 0
        for t in tensors:
            assert t.shape[0] == 1, "BlockWiseSequencePacker expects batch size 1"
            d = int(t.shape[-1])
            dtype = t.dtype
            inner = tuple(int(s) for s in t.shape[1:-1])
            ps.append(inner)
            sample_len += int(np.prod(inner)) if len(inner) > 0 else 1
            flat_pieces.append(t.reshape(-1, d))
        packed_shapes_list.append(ps)
        outer_ps.append((sample_len,))
        n_orig += sample_len

    if pad_to_multiple is not None:
        max_seq_len = next_highest_multiple(n_orig, pad_to_multiple)
    N = max_seq_len if max_seq_len is not None else n_orig
    assert N >= n_orig
    assert N % 128 == 0, (
        f"flex_attention sequence length must be a multiple of 128, got {N}.")

    numels = tuple(m for (m,) in outer_ps)
    if mask_mode == "causal_last":
        prefix_lens = tuple(
            sum(int(np.prod(s)) if len(s) > 0 else 1 for s in ps_i[:-1])
            for ps_i in packed_shapes_list)
    else:
        prefix_lens = tuple(0 for _ in numels)
    seq_ids, logical_pos, kv_prefix = _static_mask_inputs(numels, prefix_lens, N)

    # ---- device compute ----
    packed_padded = pack_and_pad_tokens(flat_pieces, n_orig, N, d, dtype)
    mask = materialize_block_mask(seq_ids, logical_pos, kv_prefix, mask_mode)

    out = dict(data_dict)
    out[packed_seq_write_key] = packed_padded
    # TODO(synk): FlexAttention's BlockMask object has no JAX/Pallas analogue;
    # we return the materialized (1, 1, N, N) bool mask
    # (the module's return_materialized_mask=True path).
    out[block_mask_write_key] = mask
    out[inner_packed_shapes_write_key] = packed_shapes_list
    out[outer_packed_shapes_write_key] = outer_ps
    # TODO(synk): emb_packing_fn_write_key (host-side closure factory for
    # expand_emb / expand_emb_per_subseq) not implemented.
    return out


# --------------------------------------------------------------------------
# Reference (pure numpy) for validation
# --------------------------------------------------------------------------
def _reference_mask(seq_ids, logical_pos, kv_prefix, mode, padding_id=-1):
    q = seq_ids[:, None]
    k = seq_ids[None, :]
    same = q == k
    not_pad = (q != padding_id) | (k != padding_id)
    n = len(seq_ids)
    pos = np.arange(n)
    if mode == "full":
        return same & not_pad
    if mode == "causal":
        return same & not_pad & (pos[None, :] <= pos[:, None])
    ql = logical_pos[:, None]
    kl = logical_pos[None, :]
    kp = kv_prefix[None, :]
    return same & ((ql >= kl) | (kl < kp)) & not_pad


if __name__ == "__main__":
    D = 32
    key = jax.random.PRNGKey(0)
    k1, k2, k3, k4 = jax.random.split(key, 4)

    # Two outer sequences (samples), two inner subsequences each
    # ("patches" flattened spatially, then "registers").
    patches_list = [
        jax.random.normal(k1, (1, 4, 4, D), jnp.float32),   # 16 tokens
        jax.random.normal(k2, (1, 3, 4, D), jnp.float32),   # 12 tokens
    ]
    registers_list = [
        jax.random.normal(k3, (1, 8, D), jnp.float32),       # 8 tokens
        jax.random.normal(k4, (1, 8, D), jnp.float32),       # 8 tokens
    ]
    data = {"patches_list": patches_list, "registers_list": registers_list}

    ok = True
    for mode in ("full", "causal", "causal_last"):
        out = block_wise_sequence_packer(
            data,
            input_list_read_keys=["patches_list", "registers_list"],
            mask_mode=mode,
            pad_to_multiple=128,
        )
        packed = jax.block_until_ready(out["packed_seq"])
        mask = jax.block_until_ready(out["block_mask"])

        # ---- validate against host reference ----
        flat_parts = []
        for p, r in zip(patches_list, registers_list):
            flat_parts.append(np.asarray(p).reshape(1, -1, D))
            flat_parts.append(np.asarray(r).reshape(1, -1, D))
        ref_tokens = np.concatenate(flat_parts, axis=1)
        N_orig = ref_tokens.shape[1]
        N = 128 * math.ceil(N_orig / 128)
        ref_packed = np.pad(ref_tokens, ((0, 0), (0, N - N_orig), (0, 0)))

        numels = [24, 20]  # 16+8, 12+8
        seq_ids = np.pad(
            np.concatenate([np.full((n,), i, np.int32)
                            for i, n in enumerate(numels)]),
            (0, N - N_orig), constant_values=PADDING_ID)
        offsets = np.array([0, 24], np.int32)
        pos = np.arange(N, dtype=np.int32)
        safe = np.clip(seq_ids, 0, None)
        logical = np.where(seq_ids != PADDING_ID, pos - offsets[safe], 0)
        prefix = np.array([16, 12], np.int32)
        kv_pref = np.where(seq_ids != PADDING_ID, prefix[safe], 0)
        ref_mask = _reference_mask(seq_ids, logical, kv_pref, mode)

        if packed.shape != (1, N, D) or mask.shape != (1, 1, N, N):
            ok = False
        if not np.array_equal(np.asarray(packed), ref_packed):
            ok = False
        if not np.array_equal(np.asarray(mask)[0, 0].astype(bool), ref_mask):
            ok = False
        if mask.dtype != jnp.bool_:
            ok = False

    print("KERNEL_OK" if ok else "KERNEL_MISMATCH")
</pallas_src>

<mosaic_0001>
module attributes {stable_mosaic.version = 11 : i64} {
  func.func @_mask_kernel(%arg0: i32, %arg1: i32, %arg2: memref<128x1xi32, #tpu.memory_space<vmem>>, %arg3: memref<1x128xi32, #tpu.memory_space<vmem>>, %arg4: memref<128x128xi32, #tpu.memory_space<vmem>>) attributes {dimension_semantics = [#tpu.dimension_semantics<parallel>, #tpu.dimension_semantics<parallel>], iteration_bounds = array<i64: 1, 1>, scalar_prefetch = 0 : i64, scratch_operands = 0 : i64, tpu.core_type = #tpu.core_type<tc>, window_params = [{transform_indices = @transform_0, window_bounds = array<i64: 128, 1>}, {transform_indices = @transform_1, window_bounds = array<i64: 1, 128>}, {transform_indices = @transform_2, window_bounds = array<i64: 128, 128>}]} {
    %c0 = arith.constant 0 : index
    %c0_0 = arith.constant 0 : index
    %0 = vector.load %arg2[%c0, %c0_0] : memref<128x1xi32, #tpu.memory_space<vmem>>, vector<128x1xi32>
    %c0_1 = arith.constant 0 : index
    %c0_2 = arith.constant 0 : index
    %1 = vector.load %arg3[%c0_1, %c0_2] : memref<1x128xi32, #tpu.memory_space<vmem>>, vector<1x128xi32>
    %2 = vector.broadcast %0 : vector<128x1xi32> to vector<128x128xi32>
    %3 = vector.broadcast %1 : vector<1x128xi32> to vector<128x128xi32>
    %4 = arith.cmpi eq, %2, %3 : vector<128x128xi32>
    %c-1_i32 = arith.constant -1 : i32
    %5 = vector.broadcast %c-1_i32 : i32 to vector<128x1xi32>
    %6 = arith.cmpi ne, %0, %5 : vector<128x1xi32>
    %c-1_i32_3 = arith.constant -1 : i32
    %7 = vector.broadcast %c-1_i32_3 : i32 to vector<1x128xi32>
    %8 = arith.cmpi ne, %1, %7 : vector<1x128xi32>
    %9 = vector.broadcast %6 : vector<128x1xi1> to vector<128x128xi1>
    %10 = vector.broadcast %8 : vector<1x128xi1> to vector<128x128xi1>
    %11 = arith.ori %9, %10 : vector<128x128xi1>
    %12 = arith.andi %4, %11 : vector<128x128xi1>
    %c0_4 = arith.constant 0 : index
    %c0_5 = arith.constant 0 : index
    %13 = vector.load %arg4[%c0_4, %c0_5] : memref<128x128xi32, #tpu.memory_space<vmem>>, vector<128x128xi32>
    %14 = arith.extui %12 : vector<128x128xi1> to vector<128x128xi32>
    %cst = arith.constant dense<0> : vector<128x128xi32>
    %15 = arith.cmpi ne, %13, %cst : vector<128x128xi32>
    tpu.vector_store %arg4[%c0_4, %c0_5], %14 {strides = array<i32>} : memref<128x128xi32, #tpu.memory_space<vmem>>, vector<128x128xi32>,
    return
  }
  func.func @transform_0(%arg0: i32, %arg1: i32) -> (i32, i32) {
    %c0_i32 = arith.constant 0 : i32
    %c0_i32_0 = arith.constant 0 : i32
    return %arg0, %c0_i32 : i32, i32
  }
  func.func @transform_1(%arg0: i32, %arg1: i32) -> (i32, i32) {
    %c0_i32 = arith.constant 0 : i32
    %c0_i32_0 = arith.constant 0 : i32
    return %c0_i32, %arg1 : i32, i32
  }
  func.func @transform_2(%arg0: i32, %arg1: i32) -> (i32, i32) {
    %c0_i32 = arith.constant 0 : i32
    return %arg0, %arg1 : i32, i32
  }
}

module attributes {stable_mosaic.version = 11 : i64} {
  func.func @_mask_kernel(%arg0: i32, %arg1: i32, %arg2: memref<128x1xi32, #tpu.memory_space<vmem>>, %arg3: memref<1x128xi32, #tpu.memory_space<vmem>>, %arg4: memref<128x128xi8, #tpu.memory_space<vmem>>) attributes {dimension_semantics = [#tpu.dimension_semantics<parallel>, #tpu.dimension_semantics<parallel>], iteration_bounds = array<i64: 1, 1>, scalar_prefetch = 0 : i64, scratch_operands = 0 : i64, tpu.core_type = #tpu.core_type<tc>, window_params = [{transform_indices = @transform_0, window_bounds = array<i64: 128, 1>}, {transform_indices = @transform_1, window_bounds = array<i64: 1, 128>}, {transform_indices = @transform_2, window_bounds = array<i64: 128, 128>}]} {
    %c0 = arith.constant 0 : index
    %c0_0 = arith.constant 0 : index
    %0 = vector.load %arg2[%c0, %c0_0] : memref<128x1xi32, #tpu.memory_space<vmem>>, vector<128x1xi32>
    %c0_1 = arith.constant 0 : index
    %c0_2 = arith.constant 0 : index
    %1 = vector.load %arg3[%c0_1, %c0_2] : memref<1x128xi32, #tpu.memory_space<vmem>>, vector<1x128xi32>
    %2 = vector.broadcast %0 : vector<128x1xi32> to vector<128x128xi32>
    %3 = vector.broadcast %1 : vector<1x128xi32> to vector<128x128xi32>
    %4 = arith.cmpi eq, %2, %3 : vector<128x128xi32>
    %c-1_i32 = arith.constant -1 : i32
    %5 = vector.broadcast %c-1_i32 : i32 to vector<128x1xi32>
    %6 = arith.cmpi ne, %0, %5 : vector<128x1xi32>
    %c-1_i32_3 = arith.constant -1 : i32
    %7 = vector.broadcast %c-1_i32_3 : i32 to vector<1x128xi32>
    %8 = arith.cmpi ne, %1, %7 : vector<1x128xi32>
    %9 = vector.broadcast %6 : vector<128x1xi1> to vector<128x128xi1>
    %10 = vector.broadcast %8 : vector<1x128xi1> to vector<128x128xi1>
    %11 = arith.ori %9, %10 : vector<128x128xi1>
    %12 = arith.andi %4, %11 : vector<128x128xi1>
    %13 = arith.extui %12 : vector<128x128xi1> to vector<128x128xi8>
    %c0_4 = arith.constant 0 : index
    %c0_5 = arith.constant 0 : index
    %14 = vector.load %arg4[%c0_4, %c0_5] : memref<128x128xi8, #tpu.memory_space<vmem>>, vector<128x128xi8>
    tpu.vector_store %arg4[%c0_4, %c0_5], %13 {strides = array<i32>} : memref<128x128xi8, #tpu.memory_space<vmem>>, vector<128x128xi8>,
    return
  }
  func.func @transform_0(%arg0: i32, %arg1: i32) -> (i32, i32) {
    %c0_i32 = arith.constant 0 : i32
    %c0_i32_0 = arith.constant 0 : i32
    return %arg0, %c0_i32 : i32, i32
  }
  func.func @transform_1(%arg0: i32, %arg1: i32) -> (i32, i32) {
    %c0_i32 = arith.constant 0 : i32
    %c0_i32_0 = arith.constant 0 : i32
    return %c0_i32, %arg1 : i32, i32
  }
  func.func @transform_2(%arg0: i32, %arg1: i32) -> (i32, i32) {
    %c0_i32 = arith.constant 0 : i32
    return %arg0, %arg1 : i32, i32
  }
}

</mosaic_0001>

<llo_original>
// kernel: tpu_custom_call.1
$region0: #{tpu_custom_call.1}
  #allocation0 [shape = 'u32[]', space=smem, size = 0x4, offset = 0x4, fixed_abs, tag = 'smem constant byte address 0x4 - core index']
  #allocation1 [shape = 'u32[72,128]{1,0:T(1,128)}', space=vmem, size = 0x9000, scoped, tag = 'internal scratch']
  %s0 = inlined_call_operand.vmem [shape: s32[128,1], index: 0, kind: input, shape index: {}]
  %s1 = inlined_call_operand.vmem [shape: s32[1,128], index: 1, kind: input, shape index: {}]
  %s2 = inlined_call_operand.vmem [shape: s32[128,128], index: 2, kind: output, shape index: {}]
  %s3 = sld [smem:[#allocation0]]
  $region18: #{tpu_custom_call.1} parent=0
    _
  %s5 = ssub.s32 1, %s3
  %s6 = scalar_select 0, %s5, %s3
  // Predicated region
  $region2: #{tpu_custom_call.1} parent=0 // pred_check
    _
  $region3: #{tpu_custom_call.1} parent=0 // pred_check_branch
    %8 = sbr.rel (0) target = $region5
  $region4: #{tpu_custom_call.1} parent=0 // pred_region
    _
  $region5: #{tpu_custom_call.1} parent=0 // pred_fallthru
    _
  // Predicated region
  $region6: #{tpu_custom_call.1} parent=0 // pred_check
    _
  $region7: #{tpu_custom_call.1} parent=0 // pred_check_branch
    %10 = sbr.rel (0) target = $region9
  $region8: #{tpu_custom_call.1} parent=0 // pred_region
    _
  $region9: #{tpu_custom_call.1} parent=0 // pred_fallthru
    _
  %v11 = vld [vmem:[%s0] sm:$0xff]
  %v12 = vld [vmem:[%s0 + $0x8] sm:$0xff]
  %v13 = vld [vmem:[%s0 + $0x10] sm:$0xff]
  %v14 = vld [vmem:[%s0 + $0x18] sm:$0xff]
  %v15 = vld [vmem:[%s0 + $0x20] sm:$0xff]
  %v16 = vld [vmem:[%s0 + $0x28] sm:$0xff]
  %v17 = vld [vmem:[%s0 + $0x30] sm:$0xff]
  %v18 = vld [vmem:[%s0 + $0x38] sm:$0xff]
  %v19 = vld [vmem:[%s0 + $0x40] sm:$0xff]
  %v20 = vld [vmem:[%s0 + $0x48] sm:$0xff]
  %v21 = vld [vmem:[%s0 + $0x50] sm:$0xff]
  %v22 = vld [vmem:[%s0 + $0x58] sm:$0xff]
  %v23 = vld [vmem:[%s0 + $0x60] sm:$0xff]
  %v24 = vld [vmem:[%s0 + $0x68] sm:$0xff]
  %v25 = vld [vmem:[%s0 + $0x70] sm:$0xff]
  %v26 = vld [vmem:[%s0 + $0x78] sm:$0xff]
  %v27 = vld [vmem:[%s1] sm:$0x1]
  %28 = vset.pattern.permute.xlu0 0
  %29 = vperm.xlu0 %28, %v11
  %v30 = vpop.permute.xlu0 %29
  %31 = vset.pattern.permute.xlu0 0
  %32 = vperm.xlu0 %31, %v12
  %v33 = vpop.permute.xlu0 %32
  %34 = vset.pattern.permute.xlu0 0
  %35 = vperm.xlu0 %34, %v13
  %v36 = vpop.permute.xlu0 %35
  %37 = vset.pattern.permute.xlu0 0
  %38 = vperm.xlu0 %37, %v14
  %v39 = vpop.permute.xlu0 %38
  %40 = vset.pattern.permute.xlu0 0
  %41 = vperm.xlu0 %40, %v15
  %v42 = vpop.permute.xlu0 %41
  %43 = vset.pattern.permute.xlu0 0
  %44 = vperm.xlu0 %43, %v16
  %v45 = vpop.permute.xlu0 %44
  %46 = vset.pattern.permute.xlu0 0
  %47 = vperm.xlu0 %46, %v17
  %v48 = vpop.permute.xlu0 %47
  %49 = vset.pattern.permute.xlu0 0
  %50 = vperm.xlu0 %49, %v18
  %v51 = vpop.permute.xlu0 %50
  %52 = vset.pattern.permute.xlu0 0
  %53 = vperm.xlu0 %52, %v19
  %v54 = vpop.permute.xlu0 %53
  %55 = vset.pattern.permute.xlu0 0
  %56 = vperm.xlu0 %55, %v20
  %v57 = vpop.permute.xlu0 %56
  %58 = vset.pattern.permute.xlu0 0
  %59 = vperm.xlu0 %58, %v21
  %v60 = vpop.permute.xlu0 %59
  %61 = vset.pattern.permute.xlu0 0
  %62 = vperm.xlu0 %61, %v22
  %v63 = vpop.permute.xlu0 %62
  %64 = vset.pattern.permute.xlu0 0
  %65 = vperm.xlu0 %64, %v23
  %v66 = vpop.permute.xlu0 %65
  %67 = vset.pattern.permute.xlu0 0
  %68 = vperm.xlu0 %67, %v24
  %v69 = vpop.permute.xlu0 %68
  %70 = vset.pattern.permute.xlu0 0
  %71 = vperm.xlu0 %70, %v25
  %v72 = vpop.permute.xlu0 %71
  %73 = vset.pattern.permute.xlu0 0
  %74 = vperm.xlu0 %73, %v26
  %v75 = vpop.permute.xlu0 %74
  %v76 = vperm.slane %v27, 0
  %vm77 = vcmp.eq.s32.totalorder %v30, %v76
  %vm78 = vcmp.eq.s32.totalorder %v33, %v76
  %vm79 = vcmp.eq.s32.totalorder %v36, %v76
  %vm80 = vcmp.eq.s32.totalorder %v39, %v76
  %vm81 = vcmp.eq.s32.totalorder %v42, %v76
  %vm82 = vcmp.eq.s32.totalorder %v45, %v76
  %vm83 = vcmp.eq.s32.totalorder %v48, %v76
  %vm84 = vcmp.eq.s32.totalorder %v51, %v76
  %vm85 = vcmp.eq.s32.totalorder %v54, %v76
  %vm86 = vcmp.eq.s32.totalorder %v57, %v76
  %vm87 = vcmp.eq.s32.totalorder %v60, %v76
  %vm88 = vcmp.eq.s32.totalorder %v63, %v76
  %vm89 = vcmp.eq.s32.totalorder %v66, %v76
  %vm90 = vcmp.eq.s32.totalorder %v69, %v76
  %vm91 = vcmp.eq.s32.totalorder %v72, %v76
  %vm92 = vcmp.eq.s32.totalorder %v75, %v76
  %vm93 = vcmp.ne.s32.totalorder %v11, 4294967295
  %vm94 = vcmp.ne.s32.totalorder %v12, 4294967295
  %vm95 = vcmp.ne.s32.totalorder %v13, 4294967295
  %vm96 = vcmp.ne.s32.totalorder %v14, 4294967295
  %vm97 = vcmp.ne.s32.totalorder %v15, 4294967295
  %vm98 = vcmp.ne.s32.totalorder %v16, 4294967295
  %vm99 = vcmp.ne.s32.totalorder %v17, 4294967295
  %vm100 = vcmp.ne.s32.totalorder %v18, 4294967295
  %vm101 = vcmp.ne.s32.totalorder %v19, 4294967295
  %vm102 = vcmp.ne.s32.totalorder %v20, 4294967295
  %vm103 = vcmp.ne.s32.totalorder %v21, 4294967295
  %vm104 = vcmp.ne.s32.totalorder %v22, 4294967295
  %vm105 = vcmp.ne.s32.totalorder %v23, 4294967295
  %vm106 = vcmp.ne.s32.totalorder %v24, 4294967295
  %vm107 = vcmp.ne.s32.totalorder %v25, 4294967295
  %vm108 = vcmp.ne.s32.totalorder %v26, 4294967295
  %vm109 = vcmp.ne.s32.totalorder %v27, 4294967295
  %v110 = vsel %vm93, 1, 0
  %v111 = vsel %vm94, 1, 0
  %v112 = vsel %vm95, 1, 0
  %v113 = vsel %vm96, 1, 0
  %v114 = vsel %vm97, 1, 0
  %v115 = vsel %vm98, 1, 0
  %v116 = vsel %vm99, 1, 0
  %v117 = vsel %vm100, 1, 0
  %v118 = vsel %vm101, 1, 0
  %v119 = vsel %vm102, 1, 0
  %v120 = vsel %vm103, 1, 0
  %v121 = vsel %vm104, 1, 0
  %v122 = vsel %vm105, 1, 0
  %v123 = vsel %vm106, 1, 0
  %v124 = vsel %vm107, 1, 0
  %v125 = vsel %vm108, 1, 0
  %126 = vset.pattern.permute.xlu0 0
  %127 = vperm.xlu0 %126, %v110
  %v128 = vpop.permute.xlu0 %127
  %129 = vset.pattern.permute.xlu0 0
  %130 = vperm.xlu0 %129, %v111
  %v131 = vpop.permute.xlu0 %130
  %132 = vset.pattern.permute.xlu0 0
  %133 = vperm.xlu0 %132, %v112
  %v134 = vpop.permute.xlu0 %133
  %135 = vset.pattern.permute.xlu0 0
  %136 = vperm.xlu0 %135, %v113
  %v137 = vpop.permute.xlu0 %136
  %138 = vset.pattern.permute.xlu0 0
  %139 = vperm.xlu0 %138, %v114
  %v140 = vpop.permute.xlu0 %139
  %141 = vset.pattern.permute.xlu0 0
  %142 = vperm.xlu0 %141, %v115
  %v143 = vpop.permute.xlu0 %142
  %144 = vset.pattern.permute.xlu0 0
  %145 = vperm.xlu0 %144, %v116
  %v146 = vpop.permute.xlu0 %145
  %147 = vset.pattern.permute.xlu0 0
  %148 = vperm.xlu0 %147, %v117
  %v149 = vpop.permute.xlu0 %148
  %150 = vset.pattern.permute.xlu0 0
  %151 = vperm.xlu0 %150, %v118
  %v152 = vpop.permute.xlu0 %151
  %153 = vset.pattern.permute.xlu0 0
  %154 = vperm.xlu0 %153, %v119
  %v155 = vpop.permute.xlu0 %154
  %156 = vset.pattern.permute.xlu0 0
  %157 = vperm.xlu0 %156, %v120
  %v158 = vpop.permute.xlu0 %157
  %159 = vset.pattern.permute.xlu0 0
  %160 = vperm.xlu0 %159, %v121
  %v161 = vpop.permute.xlu0 %160
  %162 = vset.pattern.permute.xlu0 0
  %163 = vperm.xlu0 %162, %v122
  %v164 = vpop.permute.xlu0 %163
  %165 = vset.pattern.permute.xlu0 0
  %166 = vperm.xlu0 %165, %v123
  %v167 = vpop.permute.xlu0 %166
  %168 = vset.pattern.permute.xlu0 0
  %169 = vperm.xlu0 %168, %v124
  %v170 = vpop.permute.xlu0 %169
  %171 = vset.pattern.permute.xlu0 0
  %172 = vperm.xlu0 %171, %v125
  %v173 = vpop.permute.xlu0 %172
  %vm174 = vcmp.eq.s32.totalorder %v128, 1
  %vm175 = vcmp.eq.s32.totalorder %v131, 1
  %vm176 = vcmp.eq.s32.totalorder %v134, 1
  %vm177 = vcmp.eq.s32.totalorder %v137, 1
  %vm178 = vcmp.eq.s32.totalorder %v140, 1
  %vm179 = vcmp.eq.s32.totalorder %v143, 1
  %vm180 = vcmp.eq.s32.totalorder %v146, 1
  %vm181 = vcmp.eq.s32.totalorder %v149, 1
  %vm182 = vcmp.eq.s32.totalorder %v152, 1
  %vm183 = vcmp.eq.s32.totalorder %v155, 1
  %vm184 = vcmp.eq.s32.totalorder %v158, 1
  %vm185 = vcmp.eq.s32.totalorder %v161, 1
  %vm186 = vcmp.eq.s32.totalorder %v164, 1
  %vm187 = vcmp.eq.s32.totalorder %v167, 1
  %vm188 = vcmp.eq.s32.totalorder %v170, 1
  %vm189 = vcmp.eq.s32.totalorder %v173, 1
  %v190 = vsel %vm109, 1, 0
  %v191 = vperm.slane %v190, 0
  %vm192 = vcmp.eq.s32.totalorder %v191, 1
  %vm193 = vmor %vm174, %vm192
  %vm194 = vmor %vm175, %vm192
  %vm195 = vmor %vm176, %vm192
  %vm196 = vmor %vm177, %vm192
  %vm197 = vmor %vm178, %vm192
  %vm198 = vmor %vm179, %vm192
  %vm199 = vmor %vm180, %vm192
  %vm200 = vmor %vm181, %vm192
  %vm201 = vmor %vm182, %vm192
  %vm202 = vmor %vm183, %vm192
  %vm203 = vmor %vm184, %vm192
  %vm204 = vmor %vm185, %vm192
  %vm205 = vmor %vm186, %vm192
  %vm206 = vmor %vm187, %vm192
  %vm207 = vmor %vm188, %vm192
  %vm208 = vmor %vm189, %vm192
  %vm209 = vmand %vm77, %vm193
  %vm210 = vmand %vm78, %vm194
  %vm211 = vmand %vm79, %vm195
  %vm212 = vmand %vm80, %vm196
  %vm213 = vmand %vm81, %vm197
  %vm214 = vmand %vm82, %vm198
  %vm215 = vmand %vm83, %vm199
  %vm216 = vmand %vm84, %vm200
  %vm217 = vmand %vm85, %vm201
  %vm218 = vmand %vm86, %vm202
  %vm219 = vmand %vm87, %vm203
  %vm220 = vmand %vm88, %vm204
  %vm221 = vmand %vm89, %vm205
  %vm222 = vmand %vm90, %vm206
  %vm223 = vmand %vm91, %vm207
  %vm224 = vmand %vm92, %vm208
  %v225 = vsel %vm209, 1, 0
  %v226 = vsel %vm210, 1, 0
  %v227 = vsel %vm211, 1, 0
  %v228 = vsel %vm212, 1, 0
  %v229 = vsel %vm213, 1, 0
  %v230 = vsel %vm214, 1, 0
  %v231 = vsel %vm215, 1, 0
  %v232 = vsel %vm216, 1, 0
  %v233 = vsel %vm217, 1, 0
  %v234 = vsel %vm218, 1, 0
  %v235 = vsel %vm219, 1, 0
  %v236 = vsel %vm220, 1, 0
  %v237 = vsel %vm221, 1, 0
  %v238 = vsel %vm222, 1, 0
  %v239 = vsel %vm223, 1, 0
  %v240 = vsel %vm224, 1, 0
  %241 = vst [vmem:[%s2] sm:$0xff] %v225
  %242 = vst [vmem:[%s2 + $0x8] sm:$0xff] %v226
  %243 = vst [vmem:[%s2 + $0x10] sm:$0xff] %v227
  %244 = vst [vmem:[%s2 + $0x18] sm:$0xff] %v228
  %245 = vst [vmem:[%s2 + $0x20] sm:$0xff] %v229
  %246 = vst [vmem:[%s2 + $0x28] sm:$0xff] %v230
  %247 = vst [vmem:[%s2 + $0x30] sm:$0xff] %v231
  %248 = vst [vmem:[%s2 + $0x38] sm:$0xff] %v232
  %249 = vst [vmem:[%s2 + $0x40] sm:$0xff] %v233
  %250 = vst [vmem:[%s2 + $0x48] sm:$0xff] %v234
  %251 = vst [vmem:[%s2 + $0x50] sm:$0xff] %v235
  %252 = vst [vmem:[%s2 + $0x58] sm:$0xff] %v236
  %253 = vst [vmem:[%s2 + $0x60] sm:$0xff] %v237
  %254 = vst [vmem:[%s2 + $0x68] sm:$0xff] %v238
  %255 = vst [vmem:[%s2 + $0x70] sm:$0xff] %v239
  %256 = vst [vmem:[%s2 + $0x78] sm:$0xff] %v240
  // Predicated region
  $region10: #{tpu_custom_call.1} parent=0 // pred_check
    _
  $region11: #{tpu_custom_call.1} parent=0 // pred_check_branch
    %258 = sbr.rel (0) target = $region13
  $region12: #{tpu_custom_call.1} parent=0 // pred_region
    _
  $region13: #{tpu_custom_call.1} parent=0 // pred_fallthru
    _
  // Predicated region
  $region14: #{tpu_custom_call.1} parent=0 // pred_check
    _
  $region15: #{tpu_custom_call.1} parent=0 // pred_check_branch
    %260 = sbr.rel (0) target = $region17
  $region16: #{tpu_custom_call.1} parent=0 // pred_region
    _
  $region17: #{tpu_custom_call.1} parent=0 // pred_fallthru
    _

// kernel: tpu_custom_call.1
$region0: #{tpu_custom_call.1}
  #allocation0 [shape = 'u32[]', space=smem, size = 0x4, offset = 0x4, fixed_abs, tag = 'smem constant byte address 0x4 - core index']
  #allocation1 [shape = 'u32[72,128]{1,0:T(1,128)}', space=vmem, size = 0x9000, scoped, tag = 'internal scratch']
  %s0 = inlined_call_operand.vmem [shape: s32[128,1], index: 0, kind: input, shape index: {}]
  %s1 = inlined_call_operand.vmem [shape: s32[1,128], index: 1, kind: input, shape index: {}]
  %s2 = inlined_call_operand.hbm [shape: s8[128,128], index: 2, kind: output, shape index: {}]
  %s3 = sld [smem:[#allocation0]]
  $region18: #{tpu_custom_call.1} parent=0
    _
  %s5 = ssub.s32 1, %s3
  %s6 = scalar_select 0, %s5, %s3
  $region1: #{tpu_custom_call.1} parent=0
    #allocation2 [shape = 'u8[16384]{0}', space=vmem, size = 0x4000, scoped, tag = 'output window, operand 0, single buffered']
    #allocation3 [shape = 's32[1]{0}', space=sflag, size = 0x4, scoped, tag = 'scoped memory for tpu_custom_call.1']
    %7 = vsyncpa [#allocation3], 0
    // Predicated region
    $region2: #{tpu_custom_call.1} parent=1 // pred_check
      _
    $region3: #{tpu_custom_call.1} parent=1 // pred_check_branch
      %9 = sbr.rel (0) target = $region5
    $region4: #{tpu_custom_call.1} parent=1 // pred_region
      _
    $region5: #{tpu_custom_call.1} parent=1 // pred_fallthru
      _
    // Predicated region
    $region6: #{tpu_custom_call.1} parent=1 // pred_check
      _
    $region7: #{tpu_custom_call.1} parent=1 // pred_check_branch
      %11 = sbr.rel (0) target = $region9
    $region8: #{tpu_custom_call.1} parent=1 // pred_region
      _
    $region9: #{tpu_custom_call.1} parent=1 // pred_fallthru
      _
    %v14 = vld [vmem:[%s0] sm:$0xff]
    %v15 = vld [vmem:[%s0 + $0x8] sm:$0xff]
    %v16 = vld [vmem:[%s0 + $0x10] sm:$0xff]
    %v17 = vld [vmem:[%s0 + $0x18] sm:$0xff]
    %v18 = vld [vmem:[%s0 + $0x20] sm:$0xff]
    %v19 = vld [vmem:[%s0 + $0x28] sm:$0xff]
    %v20 = vld [vmem:[%s0 + $0x30] sm:$0xff]
    %v21 = vld [vmem:[%s0 + $0x38] sm:$0xff]
    %v22 = vld [vmem:[%s0 + $0x40] sm:$0xff]
    %v23 = vld [vmem:[%s0 + $0x48] sm:$0xff]
    %v24 = vld [vmem:[%s0 + $0x50] sm:$0xff]
    %v25 = vld [vmem:[%s0 + $0x58] sm:$0xff]
    %v26 = vld [vmem:[%s0 + $0x60] sm:$0xff]
    %v27 = vld [vmem:[%s0 + $0x68] sm:$0xff]
    %v28 = vld [vmem:[%s0 + $0x70] sm:$0xff]
    %v29 = vld [vmem:[%s0 + $0x78] sm:$0xff]
    %v30 = vld [vmem:[%s1] sm:$0x1]
    %31 = vset.pattern.permute.xlu0 0
    %32 = vperm.xlu0 %31, %v14
    %v33 = vpop.permute.xlu0 %32
    %34 = vset.pattern.permute.xlu0 0
    %35 = vperm.xlu0 %34, %v15
    %v36 = vpop.permute.xlu0 %35
    %37 = vset.pattern.permute.xlu0 0
    %38 = vperm.xlu0 %37, %v16
    %v39 = vpop.permute.xlu0 %38
    %40 = vset.pattern.permute.xlu0 0
    %41 = vperm.xlu0 %40, %v17
    %v42 = vpop.permute.xlu0 %41
    %43 = vset.pattern.permute.xlu0 0
    %44 = vperm.xlu0 %43, %v18
    %v45 = vpop.permute.xlu0 %44
    %46 = vset.pattern.permute.xlu0 0
    %47 = vperm.xlu0 %46, %v19
    %v48 = vpop.permute.xlu0 %47
    %49 = vset.pattern.permute.xlu0 0
    %50 = vperm.xlu0 %49, %v20
    %v51 = vpop.permute.xlu0 %50
    %52 = vset.pattern.permute.xlu0 0
    %53 = vperm.xlu0 %52, %v21
    %v54 = vpop.permute.xlu0 %53
    %55 = vset.pattern.permute.xlu0 0
    %56 = vperm.xlu0 %55, %v22
    %v57 = vpop.permute.xlu0 %56
    %58 = vset.pattern.permute.xlu0 0
    %59 = vperm.xlu0 %58, %v23
    %v60 = vpop.permute.xlu0 %59
    %61 = vset.pattern.permute.xlu0 0
    %62 = vperm.xlu0 %61, %v24
    %v63 = vpop.permute.xlu0 %62
    %64 = vset.pattern.permute.xlu0 0
    %65 = vperm.xlu0 %64, %v25
    %v66 = vpop.permute.xlu0 %65
    %67 = vset.pattern.permute.xlu0 0
    %68 = vperm.xlu0 %67, %v26
    %v69 = vpop.permute.xlu0 %68
    %70 = vset.pattern.permute.xlu0 0
    %71 = vperm.xlu0 %70, %v27
    %v72 = vpop.permute.xlu0 %71
    %73 = vset.pattern.permute.xlu0 0
    %74 = vperm.xlu0 %73, %v28
    %v75 = vpop.permute.xlu0 %74
    %76 = vset.pattern.permute.xlu0 0
    %77 = vperm.xlu0 %76, %v29
    %v78 = vpop.permute.xlu0 %77
    %v79 = vperm.slane %v30, 0
    %vm80 = vcmp.eq.s32.totalorder %v33, %v79
    %vm81 = vcmp.eq.s32.totalorder %v36, %v79
    %vm82 = vcmp.eq.s32.totalorder %v39, %v79
    %vm83 = vcmp.eq.s32.totalorder %v42, %v79
    %vm84 = vcmp.eq.s32.totalorder %v45, %v79
    %vm85 = vcmp.eq.s32.totalorder %v48, %v79
    %vm86 = vcmp.eq.s32.totalorder %v51, %v79
    %vm87 = vcmp.eq.s32.totalorder %v54, %v79
    %vm88 = vcmp.eq.s32.totalorder %v57, %v79
    %vm89 = vcmp.eq.s32.totalorder %v60, %v79
    %vm90 = vcmp.eq.s32.totalorder %v63, %v79
    %vm91 = vcmp.eq.s32.totalorder %v66, %v79
    %vm92 = vcmp.eq.s32.totalorder %v69, %v79
    %vm93 = vcmp.eq.s32.totalorder %v72, %v79
    %vm94 = vcmp.eq.s32.totalorder %v75, %v79
    %vm95 = vcmp.eq.s32.totalorder %v78, %v79
    %vm96 = vcmp.ne.s32.totalorder %v14, 4294967295
    %vm97 = vcmp.ne.s32.totalorder %v15, 4294967295
    %vm98 = vcmp.ne.s32.totalorder %v16, 4294967295
    %vm99 = vcmp.ne.s32.totalorder %v17, 4294967295
    %vm100 = vcmp.ne.s32.totalorder %v18, 4294967295
    %vm101 = vcmp.ne.s32.totalorder %v19, 4294967295
    %vm102 = vcmp.ne.s32.totalorder %v20, 4294967295
    %vm103 = vcmp.ne.s32.totalorder %v21, 4294967295
    %vm104 = vcmp.ne.s32.totalorder %v22, 4294967295
    %vm105 = vcmp.ne.s32.totalorder %v23, 4294967295
    %vm106 = vcmp.ne.s32.totalorder %v24, 4294967295
    %vm107 = vcmp.ne.s32.totalorder %v25, 4294967295
    %vm108 = vcmp.ne.s32.totalorder %v26, 4294967295
    %vm109 = vcmp.ne.s32.totalorder %v27, 4294967295
    %vm110 = vcmp.ne.s32.totalorder %v28, 4294967295
    %vm111 = vcmp.ne.s32.totalorder %v29, 4294967295
    %vm112 = vcmp.ne.s32.totalorder %v30, 4294967295
    %v113 = vsel %vm96, 1, 0
    %v114 = vsel %vm97, 1, 0
    %v115 = vsel %vm98, 1, 0
    %v116 = vsel %vm99, 1, 0
    %v117 = vsel %vm100, 1, 0
    %v118 = vsel %vm101, 1, 0
    %v119 = vsel %vm102, 1, 0
    %v120 = vsel %vm103, 1, 0
    %v121 = vsel %vm104, 1, 0
    %v122 = vsel %vm105, 1, 0
    %v123 = vsel %vm106, 1, 0
    %v124 = vsel %vm107, 1, 0
    %v125 = vsel %vm108, 1, 0
    %v126 = vsel %vm109, 1, 0
    %v127 = vsel %vm110, 1, 0
    %v128 = vsel %vm111, 1, 0
    %129 = vset.pattern.permute.xlu0 0
    %130 = vperm.xlu0 %129, %v113
    %v131 = vpop.permute.xlu0 %130
    %132 = vset.pattern.permute.xlu0 0
    %133 = vperm.xlu0 %132, %v114
    %v134 = vpop.permute.xlu0 %133
    %135 = vset.pattern.permute.xlu0 0
    %136 = vperm.xlu0 %135, %v115
    %v137 = vpop.permute.xlu0 %136
    %138 = vset.pattern.permute.xlu0 0
    %139 = vperm.xlu0 %138, %v116
    %v140 = vpop.permute.xlu0 %139
    %141 = vset.pattern.permute.xlu0 0
    %142 = vperm.xlu0 %141, %v117
    %v143 = vpop.permute.xlu0 %142
    %144 = vset.pattern.permute.xlu0 0
    %145 = vperm.xlu0 %144, %v118
    %v146 = vpop.permute.xlu0 %145
    %147 = vset.pattern.permute.xlu0 0
    %148 = vperm.xlu0 %147, %v119
    %v149 = vpop.permute.xlu0 %148
    %150 = vset.pattern.permute.xlu0 0
    %151 = vperm.xlu0 %150, %v120
    %v152 = vpop.permute.xlu0 %151
    %153 = vset.pattern.permute.xlu0 0
    %154 = vperm.xlu0 %153, %v121
    %v155 = vpop.permute.xlu0 %154
    %156 = vset.pattern.permute.xlu0 0
    %157 = vperm.xlu0 %156, %v122
    %v158 = vpop.permute.xlu0 %157
    %159 = vset.pattern.permute.xlu0 0
    %160 = vperm.xlu0 %159, %v123
    %v161 = vpop.permute.xlu0 %160
    %162 = vset.pattern.permute.xlu0 0
    %163 = vperm.xlu0 %162, %v124
    %v164 = vpop.permute.xlu0 %163
    %165 = vset.pattern.permute.xlu0 0
    %166 = vperm.xlu0 %165, %v125
    %v167 = vpop.permute.xlu0 %166
    %168 = vset.pattern.permute.xlu0 0
    %169 = vperm.xlu0 %168, %v126
    %v170 = vpop.permute.xlu0 %169
    %171 = vset.pattern.permute.xlu0 0
    %172 = vperm.xlu0 %171, %v127
    %v173 = vpop.permute.xlu0 %172
    %174 = vset.pattern.permute.xlu0 0
    %175 = vperm.xlu0 %174, %v128
    %v176 = vpop.permute.xlu0 %175
    %vm177 = vcmp.eq.s32.totalorder %v131, 1
    %vm178 = vcmp.eq.s32.totalorder %v134, 1
    %vm179 = vcmp.eq.s32.totalorder %v137, 1
    %vm180 = vcmp.eq.s32.totalorder %v140, 1
    %vm181 = vcmp.eq.s32.totalorder %v143, 1
    %vm182 = vcmp.eq.s32.totalorder %v146, 1
    %vm183 = vcmp.eq.s32.totalorder %v149, 1
    %vm184 = vcmp.eq.s32.totalorder %v152, 1
    %vm185 = vcmp.eq.s32.totalorder %v155, 1
    %vm186 = vcmp.eq.s32.totalorder %v158, 1
    %vm187 = vcmp.eq.s32.totalorder %v161, 1
    %vm188 = vcmp.eq.s32.totalorder %v164, 1
    %vm189 = vcmp.eq.s32.totalorder %v167, 1
    %vm190 = vcmp.eq.s32.totalorder %v170, 1
    %vm191 = vcmp.eq.s32.totalorder %v173, 1
    %vm192 = vcmp.eq.s32.totalorder %v176, 1
    %v193 = vsel %vm112, 1, 0
    %v194 = vperm.slane %v193, 0
    %vm195 = vcmp.eq.s32.totalorder %v194, 1
    %vm196 = vmor %vm177, %vm195
    %vm197 = vmor %vm178, %vm195
    %vm198 = vmor %vm179, %vm195
    %vm199 = vmor %vm180, %vm195
    %vm200 = vmor %vm181, %vm195
    %vm201 = vmor %vm182, %vm195
    %vm202 = vmor %vm183, %vm195
    %vm203 = vmor %vm184, %vm195
    %vm204 = vmor %vm185, %vm195
    %vm205 = vmor %vm186, %vm195
    %vm206 = vmor %vm187, %vm195
    %vm207 = vmor %vm188, %vm195
    %vm208 = vmor %vm189, %vm195
    %vm209 = vmor %vm190, %vm195
    %vm210 = vmor %vm191, %vm195
    %vm211 = vmor %vm192, %vm195
    %vm212 = vmand %vm80, %vm196
    %vm213 = vmand %vm81, %vm197
    %vm214 = vmand %vm82, %vm198
    %vm215 = vmand %vm83, %vm199
    %vm216 = vmand %vm84, %vm200
    %vm217 = vmand %vm85, %vm201
    %vm218 = vmand %vm86, %vm202
    %vm219 = vmand %vm87, %vm203
    %vm220 = vmand %vm88, %vm204
    %vm221 = vmand %vm89, %vm205
    %vm222 = vmand %vm90, %vm206
    %vm223 = vmand %vm91, %vm207
    %vm224 = vmand %vm92, %vm208
    %vm225 = vmand %vm93, %vm209
    %vm226 = vmand %vm94, %vm210
    %vm227 = vmand %vm95, %vm211
    %vm228 = vmpackc.low %vm213, %vm212
    %vm229 = vmpackc.low %vm215, %vm214
    %v230 = vsel %vm228, 16711935, 0
    %v231 = vsel %vm229, 16711935, 0
    %v232 = vpack.c.b8 %v231, %v230
    %vm233 = vnez %v232
    %vm234 = vmpackc.low %vm217, %vm216
    %vm235 = vmpackc.low %vm219, %vm218
    %v236 = vsel %vm234, 16711935, 0
    %v237 = vsel %vm235, 16711935, 0
    %v238 = vpack.c.b8 %v237, %v236
    %vm239 = vnez %v238
    %vm240 = vmpackc.low %vm221, %vm220
    %vm241 = vmpackc.low %vm223, %vm222
    %v242 = vsel %vm240, 16711935, 0
    %v243 = vsel %vm241, 16711935, 0
    %v244 = vpack.c.b8 %v243, %v242
    %vm245 = vnez %v244
    %vm246 = vmpackc.low %vm225, %vm224
    %vm247 = vmpackc.low %vm227, %vm226
    %v248 = vsel %vm246, 16711935, 0
    %v249 = vsel %vm247, 16711935, 0
    %v250 = vpack.c.b8 %v249, %v248
    %vm251 = vnez %v250
    %v252 = vsel %vm233, 16843009, 0
    %v253 = vsel %vm239, 16843009, 0
    %v254 = vsel %vm245, 16843009, 0
    %v255 = vsel %vm251, 16843009, 0
    %256 = vst [vmem:[#allocation2] sm:$0xff] %v252
    %257 = vst [vmem:[#allocation2 + $0x8] sm:$0xff] %v253
    %258 = vst [vmem:[#allocation2 + $0x10] sm:$0xff] %v254
    %259 = vst [vmem:[#allocation2 + $0x18] sm:$0xff] %v255
    // Predicated region
    $region10: #{tpu_custom_call.1} parent=1 // pred_check
      _
    $region11: #{tpu_custom_call.1} parent=1 // pred_check_branch
      %261 = sbr.rel (0) target = $region13
    $region12: #{tpu_custom_call.1} parent=1 // pred_region
      %263 = vsyncadd [#allocation3], 0
      %s264 = sshll.u32 [#allocation2], 4
      %s265 = int_to_ptr.vmem [resolvable:$true] %s264
      %s266 = sshll.u32 %s2, 4
      %s267 = int_to_ptr.hbm [resolvable:$true] %s266
      %272 = dma.vmem_to_hbm [thread:$0]  %s265, 512, %s267, [#allocation3], 128, 128, 8
    $region13: #{tpu_custom_call.1} parent=1 // pred_fallthru
      _
    // Predicated region
    $region14: #{tpu_custom_call.1} parent=1 // pred_check
      _
    $region15: #{tpu_custom_call.1} parent=1 // pred_check_branch
      %274 = sbr.rel (0) target = $region17
    $region16: #{tpu_custom_call.1} parent=1 // pred_region
      %276 = dma.done [#allocation3], 512
    $region17: #{tpu_custom_call.1} parent=1 // pred_fallthru
      _
    %277 = vsyncpa [#allocation3], 1

</llo_original>
